<compile_context>
chip_gen: v7x
topology: tpu7x:2x2x1
jax: 0.10.0
libtpu: 0.0.40
codegen_flags: <defaults>
</compile_context>

<pallas_src>
import functools

import jax
import jax.numpy as jnp
import numpy as np
from jax import lax
from jax.experimental import pallas as pl
from jax.experimental.pallas import tpu as pltpu


def _round_up(x: int, m: int) -> int:
    return ((x + m - 1) // m) * m


def _vq_kernel(x_ref, e_ref, et_ref, e2h_ref, q_ref, idx_ref, sse_ref, *,
               k_valid: int, hw_valid: int, mask_spatial: bool):
    """One (batch, spatial-tile) grid step.

    x_ref   : [C, S]   activations tile (pipelined, NCHW-native; S lane-dense)
    e_ref   : [Kp, C]  codebook, resident               (f32, cast in wrapper)
    et_ref  : [C, Kp]  pre-transposed codebook, resident
    e2h_ref : [Kp, 1]  0.5*|e|^2, resident
    q_ref   : [C, S]   quantized tile (written in input dtype)
    idx_ref : [1, S]   int32 winning code per token
    sse_ref : [1, S]   per-token squared error (summed over C)
    """
    kp = e_ref.shape[0]
    x = x_ref[...].astype(jnp.float32)                       # [C, S]
    e = e_ref[...]                                           # [Kp, C]
    et = et_ref[...]                                         # [C, Kp]
    e2h = e2h_ref[...]                                       # [Kp, 1]
    s = x.shape[1]

    # ---- scores: x.e - 0.5|e|^2 (argmax == argmin of squared distance). MXU.
    xe = lax.dot_general(e, x, (((1,), (0,)), ((), ())),
                         preferred_element_type=jnp.float32)  # [Kp, S]
    score = xe - e2h

    row = lax.broadcasted_iota(jnp.int32, (kp, s), 0)         # code index per row
    if k_valid != kp:  # trace-time gate: only when the codebook is padded
        score = jnp.where(row < k_valid, score, -jnp.inf)

    # ---- argmax with first-tie-wins semantics (matches torch.argmin) --------
    best = jnp.max(score, axis=0, keepdims=True)              # [1, S]
    idx = jnp.min(jnp.where(score == best, row, kp), axis=0, keepdims=True)
    enc = (row == idx).astype(jnp.float32)                    # [Kp, S] one-hot (VMEM only)

    # ---- quantize: one-hot gather via MXU (f32 so values match torch exactly)
    q = lax.dot_general(et, enc, (((1,), (0,)), ((), ())),
                        preferred_element_type=jnp.float32)   # [C, S]
    q_ref[...] = q.astype(q_ref.dtype)
    idx_ref[...] = idx

    # ---- per-tile partial SSE (combined in the XLA epilogue) ----------------
    diff = q - x
    sse = jnp.sum(diff * diff, axis=0, keepdims=True)         # [1, S]
    if mask_spatial:  # trace-time gate: only when H*W was lane-padded
        col = (lax.broadcasted_iota(jnp.int32, (1, s), 1)
               + pl.program_id(1) * s)
        sse = jnp.where(col < hw_valid, sse, 0.0)
    sse_ref[...] = sse


def vector_quantizer(inputs_nchw, embedding, commitment_cost, *,
                     tile_s: int = 1024, vmem_limit_mb: int = 48):
    """Forward pass of VectorQuantizer.

    inputs_nchw: [B, C, H, W] (C == embedding_dim)
    embedding:   [K, D] codebook
    returns: (loss scalar, quantized [B,C,H,W], perplexity scalar, encodings [N,K])
    """
    b, c, h, w = inputs_nchw.shape
    k, d = embedding.shape
    assert c == d, "channel dim must equal embedding_dim"
    hw = h * w
    n = b * hw

    # Spatial (lane) tile: multiple of 128, capped by the padded H*W.
    # Budget note (v7x): resident codebook ~ Kp*C*8B + double-buffered
    # (x + q) tiles ~ 4*C*tile_s*4B + [Kp, tile_s] score/one-hot temporaries
    # ~ 3*Kp*tile_s*4B must fit the VMEM limit; drop tile_s for K >= 4096.
    tile_s = max(128, _round_up(min(int(tile_s), _round_up(hw, 128)), 128))
    num_s = -(-hw // tile_s)
    hw_pad = num_s * tile_s

    kp = _round_up(k, 8)  # codes live on the sublane axis -> multiple of 8

    # glue: free reshape only, no transpose (NCHW kept as [B, C, H*W])
    x3 = inputs_nchw.reshape(b, c, hw)
    if hw_pad != hw:
        x3 = jnp.pad(x3, ((0, 0), (0, 0), (0, hw_pad - hw)))

    emb_f32 = embedding.astype(jnp.float32)                 # cast once, not per tile
    e_p = jnp.pad(emb_f32, ((0, kp - k), (0, 0)))            # [Kp, C]
    e_t = e_p.T                                              # [C, Kp] one-time transpose
    e2h = 0.5 * jnp.sum(emb_f32 * emb_f32, axis=1)
    e2h = jnp.pad(e2h, (0, kp - k)).reshape(kp, 1)           # [Kp, 1]

    kern = functools.partial(_vq_kernel, k_valid=k, hw_valid=hw,
                             mask_spatial=(hw_pad != hw))
    q_p, idx_p, sse_p = pl.pallas_call(
        kern,
        grid=(b, num_s),
        in_specs=[
            pl.BlockSpec((None, c, tile_s), lambda bi, si: (bi, 0, si)),  # x tile
            pl.BlockSpec((kp, c), lambda bi, si: (0, 0)),                 # codebook (resident)
            pl.BlockSpec((c, kp), lambda bi, si: (0, 0)),                 # codebook^T (resident)
            pl.BlockSpec((kp, 1), lambda bi, si: (0, 0)),                 # 0.5|e|^2 (resident)
        ],
        out_specs=[
            pl.BlockSpec((None, c, tile_s), lambda bi, si: (bi, 0, si)),          # quantized (NCHW)
            pl.BlockSpec((None, None, 1, tile_s), lambda bi, si: (bi, si, 0, 0)),  # int32 indices
            pl.BlockSpec((None, None, 1, tile_s), lambda bi, si: (bi, si, 0, 0)),  # per-tile SSE row
        ],
        out_shape=(
            jax.ShapeDtypeStruct((b, c, hw_pad), inputs_nchw.dtype),
            jax.ShapeDtypeStruct((b, num_s, 1, tile_s), jnp.int32),
            jax.ShapeDtypeStruct((b, num_s, 1, tile_s), jnp.float32),
        ),
        compiler_params=pltpu.CompilerParams(
            dimension_semantics=("parallel", "parallel"),
            vmem_limit_bytes=vmem_limit_mb * 1024 * 1024,
        ),
    )(x3, e_p, e_t, e2h)

    # tiny XLA epilogue: rebuild encodings from indices, combine partial sums
    idx_flat = idx_p.reshape(b, hw_pad)[:, :hw].reshape(-1)          # [N]
    encodings = jax.nn.one_hot(idx_flat, k, dtype=jnp.float32)       # [N, K]
    mse = jnp.sum(sse_p) / float(n * d)
    loss = (1.0 + float(commitment_cost)) * mse   # q_loss + c * e_loss (fwd value)
    avg_probs = jnp.mean(encodings, axis=0)
    perplexity = jnp.exp(-jnp.sum(avg_probs * jnp.log(avg_probs + 1e-10)))
    quantized = q_p[:, :, :hw].reshape(b, c, h, w)                   # already NCHW
    return loss, quantized, perplexity, encodings


def _reference(inputs_nchw, embedding, commitment_cost):
    """Pure-JAX reference mirroring the PyTorch forward (for validation)."""
    b, c, h, w = inputs_nchw.shape
    x = jnp.transpose(inputs_nchw, (0, 2, 3, 1))
    flat = x.reshape(-1, c)
    dist = (jnp.sum(flat ** 2, axis=1, keepdims=True)
            + jnp.sum(embedding ** 2, axis=1)
            - 2.0 * flat @ embedding.T)
    idx = jnp.argmin(dist, axis=1)
    enc = jax.nn.one_hot(idx, embedding.shape[0], dtype=jnp.float32)
    q = (enc @ embedding).reshape(x.shape)
    e_loss = jnp.mean((q - x) ** 2)
    q_loss = jnp.mean((q - x) ** 2)
    loss = q_loss + commitment_cost * e_loss
    avg_probs = jnp.mean(enc, axis=0)
    ppl = jnp.exp(-jnp.sum(avg_probs * jnp.log(avg_probs + 1e-10)))
    return loss, jnp.transpose(q, (0, 3, 1, 2)), ppl, enc


if __name__ == "__main__":
    # Module hyper-parameters (small, synthetic)
    num_embeddings = 8
    embedding_dim = 4
    commitment_cost = 0.25

    key = jax.random.PRNGKey(0)
    k_emb, k_x = jax.random.split(key)

    # nn.Embedding weight init: uniform(-1/K, 1/K)
    embedding = jax.random.uniform(
        k_emb, (num_embeddings, embedding_dim), dtype=jnp.float32,
        minval=-1.0 / num_embeddings, maxval=1.0 / num_embeddings)

    # NCHW input, C == embedding_dim.  N = 2*16*16 = 512 tokens.
    x = jax.random.normal(k_x, (2, embedding_dim, 16, 16), dtype=jnp.float32)

    # tile_s=128 -> a (2, 2) grid (even tile count), exercising the tiled /
    # pipelined path and the per-tile partial-sum reduction.
    loss, quantized, perplexity, encodings = vector_quantizer(
        x, embedding, commitment_cost, tile_s=128)
    jax.block_until_ready((loss, quantized, perplexity, encodings))

    # sanity check against pure-JAX reference
    r_loss, r_q, r_ppl, r_enc = _reference(x, embedding, commitment_cost)
    np.testing.assert_allclose(np.asarray(loss), np.asarray(r_loss), rtol=1e-5, atol=1e-6)
    np.testing.assert_allclose(np.asarray(quantized), np.asarray(r_q), rtol=1e-5, atol=1e-6)
    np.testing.assert_allclose(np.asarray(perplexity), np.asarray(r_ppl), rtol=1e-5, atol=1e-6)
    np.testing.assert_allclose(np.asarray(encodings), np.asarray(r_enc), rtol=0, atol=0)

    print("KERNEL_OK")
</pallas_src>

<mosaic_0001>
module attributes {stable_mosaic.version = 11 : i64} {
  func.func @_vq_kernel(%arg0: i32, %arg1: i32, %arg2: memref<1x4x128xf32, #tpu.memory_space<vmem>>, %arg3: memref<8x4xf32, #tpu.memory_space<vmem>>, %arg4: memref<4x8xf32, #tpu.memory_space<vmem>>, %arg5: memref<8x1xf32, #tpu.memory_space<vmem>>, %arg6: memref<1x4x128xf32, #tpu.memory_space<vmem>>, %arg7: memref<1x1x1x128xi32, #tpu.memory_space<vmem>>, %arg8: memref<1x1x1x128xf32, #tpu.memory_space<vmem>>) attributes {dimension_semantics = [#tpu.dimension_semantics<parallel>, #tpu.dimension_semantics<parallel>], iteration_bounds = array<i64: 2, 2>, scalar_prefetch = 0 : i64, scratch_operands = 0 : i64, tpu.core_type = #tpu.core_type<tc>, window_params = [{transform_indices = @transform_0, window_bounds = array<i64: 1, 4, 128>}, {pipeline_mode = #tpu.pipeline_mode<synchronous>, transform_indices = @transform_1, window_bounds = array<i64: 8, 4>}, {pipeline_mode = #tpu.pipeline_mode<synchronous>, transform_indices = @transform_2, window_bounds = array<i64: 4, 8>}, {pipeline_mode = #tpu.pipeline_mode<synchronous>, transform_indices = @transform_3, window_bounds = array<i64: 8, 1>}, {transform_indices = @transform_4, window_bounds = array<i64: 1, 4, 128>}, {transform_indices = @transform_5, window_bounds = array<i64: 1, 1, 1, 128>}, {transform_indices = @transform_6, window_bounds = array<i64: 1, 1, 1, 128>}]} {
    %c0 = arith.constant 0 : index
    %c0_0 = arith.constant 0 : index
    %c0_1 = arith.constant 0 : index
    %0 = vector.load %arg2[%c0, %c0_0, %c0_1] : memref<1x4x128xf32, #tpu.memory_space<vmem>>, vector<1x4x128xf32>
    %1 = vector.shape_cast %0 : vector<1x4x128xf32> to vector<4x128xf32>
    %c0_2 = arith.constant 0 : index
    %c0_3 = arith.constant 0 : index
    %2 = vector.load %arg3[%c0_2, %c0_3] : memref<8x4xf32, #tpu.memory_space<vmem>>, vector<8x4xf32>
    %c0_4 = arith.constant 0 : index
    %c0_5 = arith.constant 0 : index
    %3 = vector.load %arg4[%c0_4, %c0_5] : memref<4x8xf32, #tpu.memory_space<vmem>>, vector<4x8xf32>
    %c0_6 = arith.constant 0 : index
    %c0_7 = arith.constant 0 : index
    %4 = vector.load %arg5[%c0_6, %c0_7] : memref<8x1xf32, #tpu.memory_space<vmem>>, vector<8x1xf32>
    %cst = arith.constant dense<0.000000e+00> : vector<8x128xf32>
    %5 = tpu.matmul %2, %1, %cst {dimension_numbers = #tpu.dot_dimension_numbers<[1], [0], [0], [1], [0, 0, 1, 1], [], []>} : vector<8x4xf32>, vector<4x128xf32>, vector<8x128xf32> -> vector<8x128xf32>
    %6 = vector.broadcast %4 : vector<8x1xf32> to vector<8x128xf32>
    %7 = arith.subf %5, %6 : vector<8x128xf32>
    %8 = tpu.iota {dimensions = array<i32: 0>} : vector<8x128xi32>
    %cst_8 = arith.constant dense<0xFF800000> : vector<128xf32>
    %9 = vector.multi_reduction <maximumf>, %7, %cst_8 [0] : vector<8x128xf32> to vector<128xf32>
    %10 = vector.shape_cast %9 : vector<128xf32> to vector<1x128xf32>
    %11 = vector.broadcast %10 : vector<1x128xf32> to vector<8x128xf32>
    %12 = arith.cmpf oeq, %7, %11 : vector<8x128xf32>
    %c8_i32 = arith.constant 8 : i32
    %13 = vector.broadcast %c8_i32 : i32 to vector<8x128xi32>
    %14 = arith.select %12, %8, %13 : vector<8x128xi1>, vector<8x128xi32>
    %cst_9 = arith.constant dense<2147483647> : vector<128xi32>
    %15 = vector.multi_reduction <minsi>, %14, %cst_9 [0] : vector<8x128xi32> to vector<128xi32>
    %16 = vector.shape_cast %15 : vector<128xi32> to vector<1x128xi32>
    %17 = vector.broadcast %16 : vector<1x128xi32> to vector<8x128xi32>
    %18 = arith.cmpi eq, %8, %17 : vector<8x128xi32>
    %19 = arith.extui %18 : vector<8x128xi1> to vector<8x128xi32>
    %20 = arith.sitofp %19 : vector<8x128xi32> to vector<8x128xf32>
    %cst_10 = arith.constant dense<0.000000e+00> : vector<4x128xf32>
    %21 = tpu.matmul %3, %20, %cst_10 {dimension_numbers = #tpu.dot_dimension_numbers<[1], [0], [0], [1], [0, 0, 1, 1], [], []>} : vector<4x8xf32>, vector<8x128xf32>, vector<4x128xf32> -> vector<4x128xf32>
    %c0_11 = arith.constant 0 : index
    %c0_12 = arith.constant 0 : index
    %c0_13 = arith.constant 0 : index
    %22 = vector.load %arg6[%c0_11, %c0_12, %c0_13] : memref<1x4x128xf32, #tpu.memory_space<vmem>>, vector<1x4x128xf32>
    %23 = vector.shape_cast %22 : vector<1x4x128xf32> to vector<4x128xf32>
    %24 = vector.shape_cast %21 : vector<4x128xf32> to vector<1x4x128xf32>
    tpu.vector_store %arg6[%c0_11, %c0_12, %c0_13], %24 {strides = array<i32>} : memref<1x4x128xf32, #tpu.memory_space<vmem>>, vector<1x4x128xf32>,
    %c0_14 = arith.constant 0 : index
    %c0_15 = arith.constant 0 : index
    %c0_16 = arith.constant 0 : index
    %c0_17 = arith.constant 0 : index
    %25 = vector.load %arg7[%c0_14, %c0_15, %c0_16, %c0_17] : memref<1x1x1x128xi32, #tpu.memory_space<vmem>>, vector<1x1x1x128xi32>
    %26 = vector.shape_cast %25 : vector<1x1x1x128xi32> to vector<1x128xi32>
    %27 = vector.shape_cast %16 : vector<1x128xi32> to vector<1x1x1x128xi32>
    tpu.vector_store %arg7[%c0_14, %c0_15, %c0_16, %c0_17], %27 {strides = array<i32>} : memref<1x1x1x128xi32, #tpu.memory_space<vmem>>, vector<1x1x1x128xi32>,
    %28 = arith.subf %21, %1 : vector<4x128xf32>
    %29 = arith.mulf %28, %28 : vector<4x128xf32>
    %cst_18 = arith.constant dense<0.000000e+00> : vector<128xf32>
    %30 = vector.multi_reduction <add>, %29, %cst_18 [0] : vector<4x128xf32> to vector<128xf32>
    %31 = vector.shape_cast %30 : vector<128xf32> to vector<1x128xf32>
    %c0_19 = arith.constant 0 : index
    %c0_20 = arith.constant 0 : index
    %c0_21 = arith.constant 0 : index
    %c0_22 = arith.constant 0 : index
    %32 = vector.load %arg8[%c0_19, %c0_20, %c0_21, %c0_22] : memref<1x1x1x128xf32, #tpu.memory_space<vmem>>, vector<1x1x1x128xf32>
    %33 = vector.shape_cast %32 : vector<1x1x1x128xf32> to vector<1x128xf32>
    %34 = vector.shape_cast %31 : vector<1x128xf32> to vector<1x1x1x128xf32>
    tpu.vector_store %arg8[%c0_19, %c0_20, %c0_21, %c0_22], %34 {strides = array<i32>} : memref<1x1x1x128xf32, #tpu.memory_space<vmem>>, vector<1x1x1x128xf32>,
    return
  }
  func.func @transform_0(%arg0: i32, %arg1: i32) -> (i32, i32, i32) {
    %c0_i32 = arith.constant 0 : i32
    %c0_i32_0 = arith.constant 0 : i32
    return %arg0, %c0_i32, %arg1 : i32, i32, i32
  }
  func.func @transform_1(%arg0: i32, %arg1: i32) -> (i32, i32) {
    %c0_i32 = arith.constant 0 : i32
    %c0_i32_0 = arith.constant 0 : i32
    %c0_i32_1 = arith.constant 0 : i32
    return %c0_i32, %c0_i32_0 : i32, i32
  }
  func.func @transform_2(%arg0: i32, %arg1: i32) -> (i32, i32) {
    %c0_i32 = arith.constant 0 : i32
    %c0_i32_0 = arith.constant 0 : i32
    %c0_i32_1 = arith.constant 0 : i32
    return %c0_i32, %c0_i32_0 : i32, i32
  }
  func.func @transform_3(%arg0: i32, %arg1: i32) -> (i32, i32) {
    %c0_i32 = arith.constant 0 : i32
    %c0_i32_0 = arith.constant 0 : i32
    %c0_i32_1 = arith.constant 0 : i32
    return %c0_i32, %c0_i32_0 : i32, i32
  }
  func.func @transform_4(%arg0: i32, %arg1: i32) -> (i32, i32, i32) {
    %c0_i32 = arith.constant 0 : i32
    %c0_i32_0 = arith.constant 0 : i32
    return %arg0, %c0_i32, %arg1 : i32, i32, i32
  }
  func.func @transform_5(%arg0: i32, %arg1: i32) -> (i32, i32, i32, i32) {
    %c0_i32 = arith.constant 0 : i32
    %c0_i32_0 = arith.constant 0 : i32
    %c0_i32_1 = arith.constant 0 : i32
    return %arg0, %arg1, %c0_i32, %c0_i32_0 : i32, i32, i32, i32
  }
  func.func @transform_6(%arg0: i32, %arg1: i32) -> (i32, i32, i32, i32) {
    %c0_i32 = arith.constant 0 : i32
    %c0_i32_0 = arith.constant 0 : i32
    %c0_i32_1 = arith.constant 0 : i32
    return %arg0, %arg1, %c0_i32, %c0_i32_0 : i32, i32, i32, i32
  }
}

</mosaic_0001>

<llo_original>
// kernel: tpu_custom_call.1
$region0: #{tpu_custom_call.1}
  #allocation0 [shape = 'u32[]', space=smem, size = 0x4, offset = 0x4, fixed_abs, tag = 'smem constant byte address 0x4 - core index']
  #allocation1 [shape = 'u32[144,128]{1,0:T(1,128)}', space=vmem, size = 0x12000, scoped, tag = 'internal scratch']
  %s0 = inlined_call_operand.vmem [shape: f32[2,4,256], index: 0, kind: input, shape index: {}]
  %s1 = inlined_call_operand.vmem [shape: f32[8,4], index: 1, kind: input, shape index: {}]
  %s2 = inlined_call_operand.vmem [shape: f32[4,8], index: 2, kind: input, shape index: {}]
  %s3 = inlined_call_operand.vmem [shape: f32[8,1], index: 3, kind: input, shape index: {}]
  %s4 = inlined_call_operand.hbm [shape: f32[2,4,256], index: 4, kind: output, shape index: {0}]
  %s5 = inlined_call_operand.hbm [shape: s32[2,2,1,128], index: 5, kind: output, shape index: {1}]
  %s6 = inlined_call_operand.hbm [shape: f32[2,2,1,128], index: 6, kind: output, shape index: {2}]
  %7 = xla_tuple %s4, %s5, %s6
  %s8 = sld [smem:[#allocation0]]
  $region65: #{tpu_custom_call.1} parent=0
    _
  %s10 = ssub.s32 1, %s8
  %s11 = scalar_select 0, %s10, %s8
  $region1: #{tpu_custom_call.1} parent=0
    #allocation2 [shape = 'u8[4096]{0}', space=vmem, size = 0x1000, scoped, tag = 'output window, operand 0']
    #allocation3 [shape = 's32[2]{0}', space=sflag, size = 0x8, scoped, tag = 'scoped memory for tpu_custom_call.1']
    #allocation4 [shape = 'u8[1024]{0}', space=vmem, size = 0x400, scoped, tag = 'output window, operand 1']
    #allocation5 [shape = 's32[2]{0}', space=sflag, size = 0x8, scoped, tag = 'scoped memory for tpu_custom_call.1']
    #allocation6 [shape = 'u8[1024]{0}', space=vmem, size = 0x400, scoped, tag = 'output window, operand 2']
    %12 = vsyncpa [#allocation3], 0
    %s13 = scalar_lea.sflag [#allocation3], 1
    %14 = vsyncpa %s13, 0
    %15 = vsyncpa [#allocation5], 0
    %s16 = scalar_lea.sflag [#allocation5], 1
    %17 = vsyncpa %s16, 0
    loop: start=0, step=1, limit=6
    $region2: #{tpu_custom_call.1} parent=1 // loop_pre_header
      _
    $region3: #{tpu_custom_call.1} parent=1 // loop_header
      %s19 = sphi 0, %s23
      %p20 = scmp.ge.s32.totalorder %s19, 6
      %s26 = sphi 0, %s38
      %s27 = sphi 0, %s34
      %s28 = sphi 0, %s26
      %s29 = sphi 0, %s27
      %s30 = sphi 0, %s28
      %s31 = sphi 0, %s29
      %s43 = sphi 0, %s45
      %s46 = sphi 0, %s43
      %s47 = sphi 0, %s46
      %s63 = sphi 0, %s47
      %s67 = sphi 0, %s67
      %s69 = sphi 0, %s67
      %s70 = sphi 0, %s69
      %s84 = sphi 0, %s70
      %s88 = sphi 0, %s88
      %s90 = sphi 0, %s88
      %s91 = sphi 0, %s90
      %s105 = sphi 0, %s91
      %s109 = sphi 0, %s109
      %s111 = sphi 0, %s109
      %s112 = sphi 0, %s111
      %s126 = sphi 0, %s112
      %s134 = sphi 0, %s136
      %s137 = sphi 0, %s134
      %s138 = sphi 0, %s137
      %s154 = sphi 0, %s138
      %s162 = sphi 0, %s164
      %s165 = sphi 0, %s162
      %s166 = sphi 0, %s165
      %s182 = sphi 0, %s166
      %s190 = sphi 0, %s192
      %s193 = sphi 0, %s190
      %s194 = sphi 0, %s193
      %s210 = sphi 0, %s194
    $region4: #{tpu_custom_call.1} parent=1 // loop_header_branch
      %22 = sbr.rel (%p20) target = $region8
    $region5: #{tpu_custom_call.1} parent=1 // loop_body
      %s24 = ssub.s32 %s19, 1
      %s25 = ssub.s32 %s19, 2
      %s32 = sadd.s32 1, %s27
      %p33 = scmp.ge.s32.totalorder %s32, 2
      %s34 = scalar_select %p33, 0, %s32
      %s35 = sadd.s32 1, %s26
      %s36 = scalar_select %p33, %s35, %s26
      %p37 = scmp.ge.s32.totalorder %s36, 2
      %s38 = scalar_select %p37, 0, %s36
      %s39 = ssub.s32 %s26, %s38
      %s40 = ssub.s32 %s27, %s34
      %s41 = sor.u32 %s39, %s40
      %p42 = scmp.eq.s32.totalorder %s41, 0
      %s44 = sadd.s32 %s43, 1
      %s45 = scalar_select %p42, %s43, %s44
      %p48 = pneg %p42
      %p49 = scmp.eq.s32.totalorder %s19, 3
      %p50 = por %p48, %p49
      %p51 = scmp.ne.s32.totalorder %s43, %s46
      %p52 = scmp.eq.s32.totalorder %s19, 0
      %p53 = por %p51, %p52
      %p54 = scmp.ne.s32.totalorder %s43, %s46
      %p55 = scmp.eq.s32.totalorder %s24, 3
      %p56 = por %p54, %p55
      %p57 = scmp.ne.s32.totalorder %s46, %s47
      %p58 = scmp.eq.s32.totalorder %s24, 0
      %p59 = por %p57, %p58
      %p60 = scmp.ne.s32.totalorder %s46, %s47
      %p61 = scmp.eq.s32.totalorder %s25, 3
      %p62 = por %p60, %p61
      %p64 = scmp.ne.s32.totalorder %s47, %s63
      %p65 = scmp.eq.s32.totalorder %s25, 0
      %p66 = por %p64, %p65
      %s68 = sadd.s32 %s67, 1
      %p71 = scmp.eq.s32.totalorder %s19, 3
      %p72 = scmp.ne.s32.totalorder %s67, %s69
      %p73 = scmp.eq.s32.totalorder %s19, 0
      %p74 = por %p72, %p73
      %p75 = scmp.ne.s32.totalorder %s67, %s69
      %p76 = scmp.eq.s32.totalorder %s24, 3
      %p77 = por %p75, %p76
      %p78 = scmp.ne.s32.totalorder %s69, %s70
      %p79 = scmp.eq.s32.totalorder %s24, 0
      %p80 = por %p78, %p79
      %p81 = scmp.ne.s32.totalorder %s69, %s70
      %p82 = scmp.eq.s32.totalorder %s25, 3
      %p83 = por %p81, %p82
      %p85 = scmp.ne.s32.totalorder %s70, %s84
      %p86 = scmp.eq.s32.totalorder %s25, 0
      %p87 = por %p85, %p86
      %s89 = sadd.s32 %s88, 1
      %p92 = scmp.eq.s32.totalorder %s19, 3
      %p93 = scmp.ne.s32.totalorder %s88, %s90
      %p94 = scmp.eq.s32.totalorder %s19, 0
      %p95 = por %p93, %p94
      %p96 = scmp.ne.s32.totalorder %s88, %s90
      %p97 = scmp.eq.s32.totalorder %s24, 3
      %p98 = por %p96, %p97
      %p99 = scmp.ne.s32.totalorder %s90, %s91
      %p100 = scmp.eq.s32.totalorder %s24, 0
      %p101 = por %p99, %p100
      %p102 = scmp.ne.s32.totalorder %s90, %s91
      %p103 = scmp.eq.s32.totalorder %s25, 3
      %p104 = por %p102, %p103
      %p106 = scmp.ne.s32.totalorder %s91, %s105
      %p107 = scmp.eq.s32.totalorder %s25, 0
      %p108 = por %p106, %p107
      %s110 = sadd.s32 %s109, 1
      %p113 = scmp.eq.s32.totalorder %s19, 3
      %p114 = scmp.ne.s32.totalorder %s109, %s111
      %p115 = scmp.eq.s32.totalorder %s19, 0
      %p116 = por %p114, %p115
      %p117 = scmp.ne.s32.totalorder %s109, %s111
      %p118 = scmp.eq.s32.totalorder %s24, 3
      %p119 = por %p117, %p118
      %p120 = scmp.ne.s32.totalorder %s111, %s112
      %p121 = scmp.eq.s32.totalorder %s24, 0
      %p122 = por %p120, %p121
      %p123 = scmp.ne.s32.totalorder %s111, %s112
      %p124 = scmp.eq.s32.totalorder %s25, 3
      %p125 = por %p123, %p124
      %p127 = scmp.ne.s32.totalorder %s112, %s126
      %p128 = scmp.eq.s32.totalorder %s25, 0
      %p129 = por %p127, %p128
      %s130 = ssub.s32 %s26, %s38
      %s131 = ssub.s32 %s27, %s34
      %s132 = sor.u32 %s130, %s131
      %p133 = scmp.eq.s32.totalorder %s132, 0
      %s135 = sadd.s32 %s134, 1
      %s136 = scalar_select %p133, %s134, %s135
      %p139 = pneg %p133
      %p140 = scmp.eq.s32.totalorder %s19, 3
      %p141 = por %p139, %p140
      %p142 = scmp.ne.s32.totalorder %s134, %s137
      %p143 = scmp.eq.s32.totalorder %s19, 0
      %p144 = por %p142, %p143
      %p145 = scmp.ne.s32.totalorder %s134, %s137
      %p146 = scmp.eq.s32.totalorder %s24, 3
      %p147 = por %p145, %p146
      %p148 = scmp.ne.s32.totalorder %s137, %s138
      %p149 = scmp.eq.s32.totalorder %s24, 0
      %p150 = por %p148, %p149
      %p151 = scmp.ne.s32.totalorder %s137, %s138
      %p152 = scmp.eq.s32.totalorder %s25, 3
      %p153 = por %p151, %p152
      %p155 = scmp.ne.s32.totalorder %s138, %s154
      %p156 = scmp.eq.s32.totalorder %s25, 0
      %p157 = por %p155, %p156
      %s158 = ssub.s32 %s26, %s38
      %s159 = ssub.s32 %s27, %s34
      %s160 = sor.u32 %s158, %s159
      %p161 = scmp.eq.s32.totalorder %s160, 0
      %s163 = sadd.s32 %s162, 1
      %s164 = scalar_select %p161, %s162, %s163
      %p167 = pneg %p161
      %p168 = scmp.eq.s32.totalorder %s19, 3
      %p169 = por %p167, %p168
      %p170 = scmp.ne.s32.totalorder %s162, %s165
      %p171 = scmp.eq.s32.totalorder %s19, 0
      %p172 = por %p170, %p171
      %p173 = scmp.ne.s32.totalorder %s162, %s165
      %p174 = scmp.eq.s32.totalorder %s24, 3
      %p175 = por %p173, %p174
      %p176 = scmp.ne.s32.totalorder %s165, %s166
      %p177 = scmp.eq.s32.totalorder %s24, 0
      %p178 = por %p176, %p177
      %p179 = scmp.ne.s32.totalorder %s165, %s166
      %p180 = scmp.eq.s32.totalorder %s25, 3
      %p181 = por %p179, %p180
      %p183 = scmp.ne.s32.totalorder %s166, %s182
      %p184 = scmp.eq.s32.totalorder %s25, 0
      %p185 = por %p183, %p184
      %s186 = ssub.s32 %s26, %s38
      %s187 = ssub.s32 %s27, %s34
      %s188 = sor.u32 %s186, %s187
      %p189 = scmp.eq.s32.totalorder %s188, 0
      %s191 = sadd.s32 %s190, 1
      %s192 = scalar_select %p189, %s190, %s191
      %p195 = pneg %p189
      %p196 = scmp.eq.s32.totalorder %s19, 3
      %p197 = por %p195, %p196
      %p198 = scmp.ne.s32.totalorder %s190, %s193
      %p199 = scmp.eq.s32.totalorder %s19, 0
      %p200 = por %p198, %p199
      %p201 = scmp.ne.s32.totalorder %s190, %s193
      %p202 = scmp.eq.s32.totalorder %s24, 3
      %p203 = por %p201, %p202
      %p204 = scmp.ne.s32.totalorder %s193, %s194
      %p205 = scmp.eq.s32.totalorder %s24, 0
      %p206 = por %p204, %p205
      %p207 = scmp.ne.s32.totalorder %s193, %s194
      %p208 = scmp.eq.s32.totalorder %s25, 3
      %p209 = por %p207, %p208
      %p211 = scmp.ne.s32.totalorder %s194, %s210
      %p212 = scmp.eq.s32.totalorder %s25, 0
      %p213 = por %p211, %p212
      %p214 = scmp.le.s32.totalorder 1, %s19
      %p215 = scmp.lt.s32.totalorder %s19, 5
      %p216 = pnand %p214, %p215
      %p217 = pneg %p216
      // Predicated region
      $region9: #{tpu_custom_call.1} parent=5 // pred_check
        _
      $region10: #{tpu_custom_call.1} parent=5 // pred_check_branch
        %219 = sbr.rel (%p216) target = $region12
      $region11: #{tpu_custom_call.1} parent=5 // pred_region
        %s220 = ssub.s32 %s19, 1
        // Predicated region
        $region13: #{tpu_custom_call.1} parent=11 // pred_check
          %p221 = pneg %p80
        $region14: #{tpu_custom_call.1} parent=11 // pred_check_branch
          %223 = sbr.rel (%p221) target = $region16
        $region15: #{tpu_custom_call.1} parent=11 // pred_region
          _
        $region16: #{tpu_custom_call.1} parent=11 // pred_fallthru
          _
        // Predicated region
        $region17: #{tpu_custom_call.1} parent=11 // pred_check
          %p224 = pneg %p101
        $region18: #{tpu_custom_call.1} parent=11 // pred_check_branch
          %226 = sbr.rel (%p224) target = $region20
        $region19: #{tpu_custom_call.1} parent=11 // pred_region
          _
        $region20: #{tpu_custom_call.1} parent=11 // pred_fallthru
          _
        // Predicated region
        $region21: #{tpu_custom_call.1} parent=11 // pred_check
          %p227 = pneg %p122
        $region22: #{tpu_custom_call.1} parent=11 // pred_check_branch
          %229 = sbr.rel (%p227) target = $region24
        $region23: #{tpu_custom_call.1} parent=11 // pred_region
          _
        $region24: #{tpu_custom_call.1} parent=11 // pred_fallthru
          _
      $region12: #{tpu_custom_call.1} parent=5 // pred_fallthru
        _
      %p230 = scmp.lt.s32.totalorder %s19, 4
      // Predicated region
      $region25: #{tpu_custom_call.1} parent=5 // pred_check
        %p231 = pneg %p230
      $region26: #{tpu_custom_call.1} parent=5 // pred_check_branch
        %233 = sbr.rel (%p231) target = $region28
      $region27: #{tpu_custom_call.1} parent=5 // pred_region
        // Predicated region
        $region29: #{tpu_custom_call.1} parent=27 // pred_check
          %p234 = pneg %p53
        $region30: #{tpu_custom_call.1} parent=27 // pred_check_branch
          %236 = sbr.rel (%p234) target = $region32
        $region31: #{tpu_custom_call.1} parent=27 // pred_region
          %p237 = scmp.lt.s32.totalorder %s26, 1
          %s238 = scalar_select %p237, %s26, 1
          %p239 = scmp.lt.s32.totalorder %s27, 1
          %s240 = scalar_select %p239, %s27, 1
          %s241 = smul.addr %s238, 2
          %s242 = sadd.s32 %s240, %s241
          %s243 = smul.addr %s242, 4
          %s244 = scalar_lea.vmem %s0, %s243
        $region32: #{tpu_custom_call.1} parent=27 // pred_fallthru
          _
      $region28: #{tpu_custom_call.1} parent=5 // pred_fallthru
        _
      %p245 = scmp.le.s32.totalorder 1, %s19
      %p246 = scmp.lt.s32.totalorder %s19, 5
      %p247 = pnand %p245, %p246
      %p248 = pneg %p247
      // Predicated region
      $region33: #{tpu_custom_call.1} parent=5 // pred_check
        _
      $region34: #{tpu_custom_call.1} parent=5 // pred_check_branch
        %250 = sbr.rel (%p247) target = $region36
      $region35: #{tpu_custom_call.1} parent=5 // pred_region
        %s251 = ssub.s32 %s19, 1
        %p252 = scmp.lt.s32.totalorder %s28, 1
        %s253 = scalar_select %p252, %s28, 1
        %p254 = scmp.lt.s32.totalorder %s29, 1
        %s255 = scalar_select %p254, %s29, 1
        %s256 = smul.addr %s253, 2
        %s257 = sadd.s32 %s255, %s256
        %s258 = smul.addr %s257, 4
        %s259 = scalar_lea.vmem %s0, %s258
        %p260 = pneg %p59
        %p261 = pneg %p56
        %p262 = pneg %p80
        %p263 = pneg %p77
        %p264 = pneg %p101
        %p265 = pneg %p98
        %p266 = pneg %p122
        %p267 = pneg %p119
        %p268 = pneg %p150
        %p269 = pneg %p147
        %s270 = sand.u32 %s137, 1
        %s271 = scalar_lea.sflag [#allocation3], %s270
        %s272 = sand.u32 %s137, 1
        %s273 = smul.addr %s272, 4
        %s274 = scalar_lea.vmem [#allocation2], %s273
        %p275 = pneg %p178
        %p276 = pneg %p175
        %s277 = sand.u32 %s24, 1
        %s278 = scalar_lea.sflag [#allocation5], %s277
        %s279 = sand.u32 %s165, 1
        %s280 = scalar_lea.vmem [#allocation4], %s279
        %p281 = pneg %p206
        %p282 = pneg %p203
        %s283 = sand.u32 %s24, 1
        %s284 = scalar_lea.sflag [#allocation5], %s283
        %s285 = sand.u32 %s193, 1
        %s286 = scalar_lea.vmem [#allocation6], %s285
        %p287 = scmp.lt.s32.totalorder %s28, 1
        %s288 = scalar_select %p287, %s28, 1
        %p289 = scmp.lt.s32.totalorder %s29, 1
        %s290 = scalar_select %p289, %s29, 1
        %s291 = smul.addr %s288, 2
        %s292 = sadd.s32 %s290, %s291
        %s293 = smul.addr %s292, 4
        %s294 = scalar_lea.vmem %s0, %s293
        %v295 = vld [vmem:[%s294] sm:$0xf]
        %v296 = vld [vmem:[%s1] sm:$0xff]
        %v297 = vld [vmem:[%s2] sm:$0xf]
        %v298 = vld [vmem:[%s3] sm:$0xff]
        %vm299 = vcmask 31744
        %v301 = vsel %vm299, %v296, 0
        %vm303 = vcmask 1043456
        %v305 = vsel %vm303, %v295, 0
        %307 = vmatprep.subr.mxu0 0.0
        %308 = vmatpush1.msra.mxu0 %v305
        %309 = vmatprep.subr.mxu0 0.0
        %310 = vmatpush1.msra.mxu0 0.0
        %311 = vmatprep.subr.mxu0 0.0
        %312 = vmatpush1.msra.mxu0 0.0
        %313 = vmatprep.subr.mxu0 0.0
        %314 = vmatpush1.msra.mxu0 0.0
        %315 = vmatprep.subr.mxu0 0.0
        %316 = vmatpush1.msra.mxu0 0.0
        %317 = vmatprep.subr.mxu0 0.0
        %318 = vmatpush1.msra.mxu0 0.0
        %319 = vmatprep.subr.mxu0 0.0
        %320 = vmatpush1.msra.mxu0 0.0
        %321 = vmatprep.subr.mxu0 0.0
        %322 = vmatpush1.msra.mxu0 0.0
        %323 = vmatprep.subr.mxu0 0.0
        %324 = vmatpush1.msra.mxu0 0.0
        %325 = vmatprep.subr.mxu0 0.0
        %326 = vmatpush1.msra.mxu0 0.0
        %327 = vmatprep.subr.mxu0 0.0
        %328 = vmatpush1.msra.mxu0 0.0
        %329 = vmatprep.subr.mxu0 0.0
        %330 = vmatpush1.msra.mxu0 0.0
        %331 = vmatprep.subr.mxu0 0.0
        %332 = vmatpush1.msra.mxu0 0.0
        %333 = vmatprep.subr.mxu0 0.0
        %334 = vmatpush1.msra.mxu0 0.0
        %335 = vmatprep.subr.mxu0 0.0
        %336 = vmatpush1.msra.mxu0 0.0
        %337 = vmatprep.subr.mxu0 0.0
        %338 = vmatpush1.msra.mxu0 0.0
        %339 = vmatprep.subr.mxu0 0.0
        %340 = vmatpush1.msra.mxu0 0.0
        %341 = vmatprep.subr.mxu0 0.0
        %342 = vmatpush1.msra.mxu0 0.0
        %343 = vmatprep.subr.mxu0 0.0
        %344 = vmatpush1.msra.mxu0 0.0
        %345 = vmatprep.subr.mxu0 0.0
        %346 = vmatpush1.msra.mxu0 0.0
        %347 = vmatprep.subr.mxu0 0.0
        %348 = vmatpush1.msra.mxu0 0.0
        %349 = vmatprep.subr.mxu0 0.0
        %350 = vmatpush1.msra.mxu0 0.0
        %351 = vmatprep.subr.mxu0 0.0
        %352 = vmatpush1.msra.mxu0 0.0
        %353 = vmatprep.subr.mxu0 0.0
        %354 = vmatpush1.msra.mxu0 0.0
        %355 = vmatprep.subr.mxu0 0.0
        %356 = vmatpush1.msra.mxu0 0.0
        %357 = vmatprep.subr.mxu0 0.0
        %358 = vmatpush1.msra.mxu0 0.0
        %359 = vmatprep.subr.mxu0 0.0
        %360 = vmatpush1.msra.mxu0 0.0
        %361 = vmatprep.subr.mxu0 0.0
        %362 = vmatpush1.msra.mxu0 0.0
        %363 = vmatprep.subr.mxu0 0.0
        %364 = vmatpush1.msra.mxu0 0.0
        %365 = vmatprep.subr.mxu0 0.0
        %366 = vmatpush1.msra.mxu0 0.0
        %367 = vmatprep.subr.mxu0 0.0
        %368 = vmatpush1.msra.mxu0 0.0
        %369 = vmatprep.subr.mxu0 0.0
        %370 = vmatpush1.msra.mxu0 0.0
        %371 = vmatprep.mubr.f32.mxu0 0.0
        %372 = vmatmul.mubr.f32.gmra.mrb[0].mxu0 %v301
        %v373 = vpop.f32.mrb[0].mxu0
        %v374 = vadd.f32 0.0, %v373
        %v375 = vpop.f32.mrb[0].mxu0
        %376 = vdwg.mxu0
        %378 = vset.pattern.permute.xlu0 0
        %379 = vperm.xlu0 %378, %v298
        %v380 = vpop.permute.xlu0 %379
        %v382 = vsub.f32 %v374, %v380
        %v383 = vlaneseq
        %v384 = vshrl.u32 %v383, 7
        %v385 = vrot.slane %v382, 4
        %v386 = vmax.f32 %v382, %v385
        %v387 = vrot.slane %v386, 2
        %v388 = vmax.f32 %v386, %v387
        %v389 = vrot.slane %v388, 1
        %v390 = vmax.f32 %v388, %v389
        %vm391 = vcmp.eq.f32.partialorder %v382, %v390
        %v392 = vsel %vm391, %v384, 8
        %v393 = vrot.slane %v392, 4
        %vm394 = vcmp.lt.s32.totalorder %v392, %v393
        %v395 = vsel %vm394, %v392, %v393
        %v396 = vrot.slane %v395, 2
        %vm397 = vcmp.lt.s32.totalorder %v395, %v396
        %v398 = vsel %vm397, %v395, %v396
        %v399 = vrot.slane %v398, 1
        %vm400 = vcmp.lt.s32.totalorder %v398, %v399
        %v401 = vsel %vm400, %v398, %v399
        %vm402 = vcmp.eq.s32.totalorder %v384, %v401
        %v403 = vsel %vm402, 1, 0
        %v404 = vcvt.s32.f32 %v403
        %vm405 = vcmask 64512
        %v407 = vsel %vm405, %v297, 0
        %409 = vmatprep.subr.mxu0 0.0
        %410 = vmatpush1.msra.mxu0 %v404
        %411 = vmatprep.subr.mxu0 0.0
        %412 = vmatpush1.msra.mxu0 0.0
        %413 = vmatprep.subr.mxu0 0.0
        %414 = vmatpush1.msra.mxu0 0.0
        %415 = vmatprep.subr.mxu0 0.0
        %416 = vmatpush1.msra.mxu0 0.0
        %417 = vmatprep.subr.mxu0 0.0
        %418 = vmatpush1.msra.mxu0 0.0
        %419 = vmatprep.subr.mxu0 0.0
        %420 = vmatpush1.msra.mxu0 0.0
        %421 = vmatprep.subr.mxu0 0.0
        %422 = vmatpush1.msra.mxu0 0.0
        %423 = vmatprep.subr.mxu0 0.0
        %424 = vmatpush1.msra.mxu0 0.0
        %425 = vmatprep.subr.mxu0 0.0
        %426 = vmatpush1.msra.mxu0 0.0
        %427 = vmatprep.subr.mxu0 0.0
        %428 = vmatpush1.msra.mxu0 0.0
        %429 = vmatprep.subr.mxu0 0.0
        %430 = vmatpush1.msra.mxu0 0.0
        %431 = vmatprep.subr.mxu0 0.0
        %432 = vmatpush1.msra.mxu0 0.0
        %433 = vmatprep.subr.mxu0 0.0
        %434 = vmatpush1.msra.mxu0 0.0
        %435 = vmatprep.subr.mxu0 0.0
        %436 = vmatpush1.msra.mxu0 0.0
        %437 = vmatprep.subr.mxu0 0.0
        %438 = vmatpush1.msra.mxu0 0.0
        %439 = vmatprep.subr.mxu0 0.0
        %440 = vmatpush1.msra.mxu0 0.0
        %441 = vmatprep.subr.mxu0 0.0
        %442 = vmatpush1.msra.mxu0 0.0
        %443 = vmatprep.subr.mxu0 0.0
        %444 = vmatpush1.msra.mxu0 0.0
        %445 = vmatprep.subr.mxu0 0.0
        %446 = vmatpush1.msra.mxu0 0.0
        %447 = vmatprep.subr.mxu0 0.0
        %448 = vmatpush1.msra.mxu0 0.0
        %449 = vmatprep.subr.mxu0 0.0
        %450 = vmatpush1.msra.mxu0 0.0
        %451 = vmatprep.subr.mxu0 0.0
        %452 = vmatpush1.msra.mxu0 0.0
        %453 = vmatprep.subr.mxu0 0.0
        %454 = vmatpush1.msra.mxu0 0.0
        %455 = vmatprep.subr.mxu0 0.0
        %456 = vmatpush1.msra.mxu0 0.0
        %457 = vmatprep.subr.mxu0 0.0
        %458 = vmatpush1.msra.mxu0 0.0
        %459 = vmatprep.subr.mxu0 0.0
        %460 = vmatpush1.msra.mxu0 0.0
        %461 = vmatprep.subr.mxu0 0.0
        %462 = vmatpush1.msra.mxu0 0.0
        %463 = vmatprep.subr.mxu0 0.0
        %464 = vmatpush1.msra.mxu0 0.0
        %465 = vmatprep.subr.mxu0 0.0
        %466 = vmatpush1.msra.mxu0 0.0
        %467 = vmatprep.subr.mxu0 0.0
        %468 = vmatpush1.msra.mxu0 0.0
        %469 = vmatprep.subr.mxu0 0.0
        %470 = vmatpush1.msra.mxu0 0.0
        %471 = vmatprep.subr.mxu0 0.0
        %472 = vmatpush1.msra.mxu0 0.0
        %473 = vmatprep.mubr.f32.mxu0 0.0
        %474 = vmatmul.mubr.f32.gmra.mrb[0].mxu0 %v407
        %v475 = vpop.f32.mrb[0].mxu0
        %v476 = vadd.f32 0.0, %v475
        %v477 = vpop.f32.mrb[0].mxu0
        %478 = vdwg.mxu0
        %479 = vst [vmem:[%s274] sm:$0xf] %v476
        %480 = vst [vmem:[%s280] sm:$0x1] %v401
        %v481 = vsub.f32 %v476, %v295
        %v482 = vmul.f32 %v481, %v481
        %v483 = vsel %vm303, %v482, 0.0
        %v484 = vrot.slane %v483, 4
        %v485 = vadd.f32 %v483, %v484
        %v486 = vrot.slane %v485, 2
        %v487 = vadd.f32 %v485, %v486
        %v488 = vrot.slane %v487, 1
        %v489 = vadd.f32 %v487, %v488
        %490 = vst [vmem:[%s286] sm:$0x1] %v489
        %s491 = sand.u32 %s137, 1
        %s492 = scalar_lea.sflag [#allocation3], %s491
        %s493 = sand.u32 %s137, 1
        %s494 = smul.addr %s493, 4
        %s495 = scalar_lea.vmem [#allocation2], %s494
        %s496 = sand.u32 %s24, 1
        %s497 = scalar_lea.sflag [#allocation5], %s496
        %s498 = sand.u32 %s165, 1
        %s499 = scalar_lea.vmem [#allocation4], %s498
        %s500 = sand.u32 %s24, 1
        %s501 = scalar_lea.sflag [#allocation5], %s500
        %s502 = sand.u32 %s193, 1
        %s503 = scalar_lea.vmem [#allocation6], %s502
        // Predicated region
        $region37: #{tpu_custom_call.1} parent=35 // pred_check
          %p504 = pneg %p147
        $region38: #{tpu_custom_call.1} parent=35 // pred_check_branch
          %506 = sbr.rel (%p504) target = $region40
        $region39: #{tpu_custom_call.1} parent=35 // pred_region
          %s508 = ssub.s32 64, 64
          %509 = vsyncadd %s492, %s508
          %s510 = smul.addr %s28, 2
          %s511 = sadd.s32 %s29, %s510
          %s512 = smul.addr %s511, 64
          %s513 = scalar_lea.hbm %s4, %s512
          %s515 = sshll.u32 %s495, 4
          %s516 = int_to_ptr.vmem [resolvable:$true] %s515
          %518 = dma.vmem_to_hbm [thread:$0]  %s516, 64, %s513, %s492
        $region40: #{tpu_custom_call.1} parent=35 // pred_fallthru
          _
        // Predicated region
        $region41: #{tpu_custom_call.1} parent=35 // pred_check
          %p519 = pneg %p175
        $region42: #{tpu_custom_call.1} parent=35 // pred_check_branch
          %521 = sbr.rel (%p519) target = $region44
        $region43: #{tpu_custom_call.1} parent=35 // pred_region
          %s523 = ssub.s32 16, 16
          %524 = vsyncadd %s497, %s523
          %s525 = smul.addr %s28, 2
          %s526 = sadd.s32 %s29, %s525
          %s527 = smul.addr %s526, 16
          %s528 = scalar_lea.hbm %s5, %s527
          %s530 = sshll.u32 %s499, 4
          %s531 = int_to_ptr.vmem [resolvable:$true] %s530
          %533 = dma.vmem_to_hbm [thread:$0]  %s531, 16, %s528, %s497
        $region44: #{tpu_custom_call.1} parent=35 // pred_fallthru
          _
        // Predicated region
        $region45: #{tpu_custom_call.1} parent=35 // pred_check
          %p534 = pneg %p203
        $region46: #{tpu_custom_call.1} parent=35 // pred_check_branch
          %536 = sbr.rel (%p534) target = $region48
        $region47: #{tpu_custom_call.1} parent=35 // pred_region
          %s538 = ssub.s32 16, 16
          %539 = vsyncadd %s501, %s538
          %s540 = smul.addr %s28, 2
          %s541 = sadd.s32 %s29, %s540
          %s542 = smul.addr %s541, 16
          %s543 = scalar_lea.hbm %s6, %s542
          %s545 = sshll.u32 %s503, 4
          %s546 = int_to_ptr.vmem [resolvable:$true] %s545
          %548 = dma.vmem_to_hbm [thread:$0]  %s546, 16, %s543, %s501
        $region48: #{tpu_custom_call.1} parent=35 // pred_fallthru
          _
      $region36: #{tpu_custom_call.1} parent=5 // pred_fallthru
        _
      %p549 = scmp.le.s32.totalorder 2, %s19
      // Predicated region
      $region49: #{tpu_custom_call.1} parent=5 // pred_check
        %p550 = pneg %p549
      $region50: #{tpu_custom_call.1} parent=5 // pred_check_branch
        %552 = sbr.rel (%p550) target = $region52
      $region51: #{tpu_custom_call.1} parent=5 // pred_region
        %s553 = ssub.s32 %s19, 2
        // Predicated region
        $region53: #{tpu_custom_call.1} parent=51 // pred_check
          %p554 = pneg %p153
        $region54: #{tpu_custom_call.1} parent=51 // pred_check_branch
          %556 = sbr.rel (%p554) target = $region56
        $region55: #{tpu_custom_call.1} parent=51 // pred_region
          %s557 = sand.u32 %s138, 1
          %s558 = scalar_lea.sflag [#allocation3], %s557
          %s559 = sand.u32 %s138, 1
          %s560 = smul.addr %s559, 4
          %s561 = scalar_lea.vmem [#allocation2], %s560
          %562 = dma.done %s558, 64
        $region56: #{tpu_custom_call.1} parent=51 // pred_fallthru
          _
        // Predicated region
        $region57: #{tpu_custom_call.1} parent=51 // pred_check
          %p563 = pneg %p181
        $region58: #{tpu_custom_call.1} parent=51 // pred_check_branch
          %565 = sbr.rel (%p563) target = $region60
        $region59: #{tpu_custom_call.1} parent=51 // pred_region
          %s566 = sand.u32 %s25, 1
          %s567 = scalar_lea.sflag [#allocation5], %s566
          %s568 = sand.u32 %s166, 1
          %s569 = scalar_lea.vmem [#allocation4], %s568
          %570 = dma.done %s567, 16
        $region60: #{tpu_custom_call.1} parent=51 // pred_fallthru
          _
        // Predicated region
        $region61: #{tpu_custom_call.1} parent=51 // pred_check
          %p571 = pneg %p209
        $region62: #{tpu_custom_call.1} parent=51 // pred_check_branch
          %573 = sbr.rel (%p571) target = $region64
        $region63: #{tpu_custom_call.1} parent=51 // pred_region
          %s574 = sand.u32 %s25, 1
          %s575 = scalar_lea.sflag [#allocation5], %s574
          %s576 = sand.u32 %s194, 1
          %s577 = scalar_lea.vmem [#allocation6], %s576
          %578 = dma.done %s575, 16
        $region64: #{tpu_custom_call.1} parent=51 // pred_fallthru
          _
      $region52: #{tpu_custom_call.1} parent=5 // pred_fallthru
        _
    $region6: #{tpu_custom_call.1} parent=1 // loop_footer
      %s23 = sadd.s32 1, %s19
    $region7: #{tpu_custom_call.1} parent=1 // loop_footer_branch
      %18 = sbr.rel target = $region3
    $region8: #{tpu_custom_call.1} parent=1 // loop_exit
      _
    %579 = vsyncpa [#allocation3], 1
    %s580 = scalar_lea.sflag [#allocation3], 1
    %581 = vsyncpa %s580, 1
    %582 = vsyncpa [#allocation5], 1
    %s583 = scalar_lea.sflag [#allocation5], 1
    %584 = vsyncpa %s583, 1

</llo_original>
